<compile_context>
chip_gen: v7x
topology: tpu7x:2x2x1
jax: 0.10.0
libtpu: 0.0.40
codegen_flags: <defaults>
</compile_context>

<pallas_src>
import functools

import jax
import jax.numpy as jnp
from jax.experimental import pallas as pl
from jax.experimental.pallas import tpu as pltpu


def _ce_label_smooth_kernel(
    logits_ref, targets_ref, partial_ref, *, epsilon, num_classes, batch_size, block_b
):
    i = pl.program_id(0)
    x = logits_ref[...].astype(jnp.float32)            # (TB, C) f32 working copy
    tb, c = x.shape
    labels = targets_ref[...]                           # (TB, 1) int32

    # Numerically stable logsumexp over classes (per row).
    m = jnp.max(x, axis=1, keepdims=True)                               # (TB, 1)
    lse = jnp.log(jnp.sum(jnp.exp(x - m), axis=1, keepdims=True))       # (TB, 1)

    # Fused weighted reduction: one pass computes
    #   (1-eps) * x[row, target[row]] + (eps/K) * sum_c x[row, c]
    # via per-element weights (no separate one-hot / x_sum sweeps kept live).
    cls_ids = jax.lax.broadcasted_iota(jnp.int32, (tb, c), 1)
    uni = epsilon / num_classes
    w = jnp.where(cls_ids == labels, (1.0 - epsilon) + uni, uni)        # (TB, C)
    weighted = jnp.sum(w * x, axis=1, keepdims=True)                    # (TB, 1)

    # per-row loss = sum_c smoothed_c * (m + lse - x_c)  (smoothed row sums to 1)
    row_loss = (m + lse) - weighted                                      # (TB, 1)

    # Mask rows beyond the true batch size (padded last tile).  MUST stay a
    # select: padded rows may hold inf/NaN garbage and a multiplicative mask
    # would propagate it.
    row_ids = i * block_b + jax.lax.broadcasted_iota(jnp.int32, (tb, 1), 0)
    row_loss = jnp.where(row_ids < batch_size, row_loss, 0.0)

    partial_ref[0, 0] = jnp.sum(row_loss)


def _scoped_vmem_limit_bytes():
    """Generation-aware scoped-VMEM limit (64 MiB on v5e/v6e, 44 MiB on v7x)."""
    phys = None
    try:
        info = pltpu.get_tpu_info()
        phys = getattr(info, "vmem_capacity_bytes", None)
    except Exception:
        phys = None
    if phys is not None and phys >= 96 * 1024 * 1024:
        return 64 * 1024 * 1024          # 128-MiB-VMEM parts (v5e / v6e)
    return 44 * 1024 * 1024              # 64-MiB-VMEM parts (v7x) / unknown


def cross_entropy_label_smooth(
    logits, targets, *, num_classes, epsilon=0.1, block_b=None, vmem_limit_bytes=None
):
    """logits: (B, num_classes) float (f32 or bf16); targets: (B,) int class indices."""
    b, c = logits.shape
    assert num_classes == c, "num_classes must match logits.shape[1]"
    targets2d = targets.astype(jnp.int32).reshape(b, 1)

    itemsize = jnp.dtype(logits.dtype).itemsize
    sub = {4: 8, 2: 16, 1: 32}.get(itemsize, 8)          # sublane granularity per dtype

    if vmem_limit_bytes is None:
        vmem_limit_bytes = _scoped_vmem_limit_bytes()

    if block_b is None:
        # Per-row VMEM cost:
        #   2 x native-dtype logits tile (double buffering)        : 2*c*itemsize
        #   ~2 f32-sized in-kernel temporaries (cast + working)    : 2*c*4
        #   2 x (TB,1) int32 targets tile, lane-padded to 512 B/row: 2*512
        per_row = c * (2 * itemsize + 2 * 4) + 2 * 512
        budget = vmem_limit_bytes - 4 * 1024 * 1024       # headroom for Pallas/grid overhead
        block_b = max(sub, min(8192, budget // per_row))
    if block_b >= b:
        block_b = b                                       # single tile = full batch dim
    else:
        block_b = max(sub, (block_b // sub) * sub)        # keep sublane alignment
    num_tiles = (b + block_b - 1) // block_b

    kernel = functools.partial(
        _ce_label_smooth_kernel,
        epsilon=float(epsilon),
        num_classes=int(num_classes),
        batch_size=int(b),
        block_b=int(block_b),
    )

    cost = pl.CostEstimate(
        flops=6 * b * c,
        transcendentals=b * c + b,
        bytes_accessed=b * c * itemsize + b * 4 + num_tiles * 4,
    )

    partials = pl.pallas_call(
        kernel,
        grid=(num_tiles,),
        in_specs=[
            pl.BlockSpec((block_b, c), lambda i: (i, 0)),
            pl.BlockSpec((block_b, 1), lambda i: (i, 0)),
        ],
        out_specs=pl.BlockSpec((1, 1), lambda i: (i, 0), memory_space=pltpu.SMEM),
        out_shape=jax.ShapeDtypeStruct((num_tiles, 1), jnp.float32),
        compiler_params=pltpu.CompilerParams(
            dimension_semantics=("parallel",),
            vmem_limit_bytes=int(vmem_limit_bytes),
        ),
        cost_estimate=cost,
    )(logits, targets2d)

    # Tiny final reduce in plain JAX; divide by the TRUE batch size.
    return jnp.sum(partials) / b


def _reference(logits, targets, *, num_classes, epsilon=0.1):
    log_probs = jax.nn.log_softmax(logits.astype(jnp.float32), axis=1)
    one_hot = jax.nn.one_hot(targets, num_classes, dtype=jnp.float32)
    smoothed = (1.0 - epsilon) * one_hot + epsilon / num_classes
    return jnp.sum(jnp.mean(-smoothed * log_probs, axis=0))


if __name__ == "__main__":
    key = jax.random.PRNGKey(0)
    k1, k2, k3, k4, k5, k6, k7, k8 = jax.random.split(key, 8)

    # Test 1: small f32, auto tile sizing (single tile).
    B, C = 8, 16
    logits = jax.random.normal(k1, (B, C), dtype=jnp.float32)
    targets = jax.random.randint(k2, (B,), 0, C, dtype=jnp.int32)
    loss = jax.block_until_ready(
        cross_entropy_label_smooth(logits, targets, num_classes=C, epsilon=0.1)
    )
    ref = _reference(logits, targets, num_classes=C, epsilon=0.1)
    assert jnp.allclose(loss, ref, atol=1e-5, rtol=1e-5), (loss, ref)

    # Test 2: bf16 logits, multi-tile grid (HBM traffic stays bf16, f32 in-kernel).
    B2, C2 = 48, 24
    logits2 = jax.random.normal(k3, (B2, C2), dtype=jnp.float32).astype(jnp.bfloat16)
    targets2 = jax.random.randint(k4, (B2,), 0, C2, dtype=jnp.int32)
    loss2 = jax.block_until_ready(
        cross_entropy_label_smooth(
            logits2, targets2, num_classes=C2, epsilon=0.1, block_b=16
        )
    )
    ref2 = _reference(logits2, targets2, num_classes=C2, epsilon=0.1)
    assert jnp.allclose(loss2, ref2, atol=1e-4, rtol=1e-4), (loss2, ref2)

    # Test 3: batch not divisible by the tile (exercises in-kernel row masking).
    B3, C3 = 20, 16
    logits3 = jax.random.normal(k5, (B3, C3), dtype=jnp.float32)
    targets3 = jax.random.randint(k6, (B3,), 0, C3, dtype=jnp.int32)
    loss3 = jax.block_until_ready(
        cross_entropy_label_smooth(
            logits3, targets3, num_classes=C3, epsilon=0.1, block_b=8
        )
    )
    ref3 = _reference(logits3, targets3, num_classes=C3, epsilon=0.1)
    assert jnp.allclose(loss3, ref3, atol=1e-5, rtol=1e-5), (loss3, ref3)

    # Test 4: non-128-multiple class dim, auto byte-based sizing path.
    B4, C4 = 192, 200
    logits4 = jax.random.normal(k7, (B4, C4), dtype=jnp.float32)
    targets4 = jax.random.randint(k8, (B4,), 0, C4, dtype=jnp.int32)
    loss4 = jax.block_until_ready(
        cross_entropy_label_smooth(logits4, targets4, num_classes=C4, epsilon=0.1)
    )
    ref4 = _reference(logits4, targets4, num_classes=C4, epsilon=0.1)
    assert jnp.allclose(loss4, ref4, atol=1e-5, rtol=1e-5), (loss4, ref4)

    print("KERNEL_OK")
</pallas_src>

<mosaic_0001>
module attributes {stable_mosaic.version = 11 : i64} {
  func.func @_ce_label_smooth_kernel(%arg0: i32, %arg1: memref<8x16xf32, #tpu.memory_space<vmem>>, %arg2: memref<8x1xi32, #tpu.memory_space<vmem>>, %arg3: memref<1x1xf32, #tpu.memory_space<smem>>) attributes {dimension_semantics = [#tpu.dimension_semantics<parallel>], iteration_bounds = array<i64: 1>, scalar_prefetch = 0 : i64, scratch_operands = 0 : i64, tpu.core_type = #tpu.core_type<tc>, window_params = [{transform_indices = @transform_0, window_bounds = array<i64: 8, 16>}, {transform_indices = @transform_1, window_bounds = array<i64: 8, 1>}, {transform_indices = @transform_2, window_bounds = array<i64: 1, 1>}]} {
    %c0 = arith.constant 0 : index
    %c0_0 = arith.constant 0 : index
    %0 = vector.load %arg1[%c0, %c0_0] : memref<8x16xf32, #tpu.memory_space<vmem>>, vector<8x16xf32>
    %c0_1 = arith.constant 0 : index
    %c0_2 = arith.constant 0 : index
    %1 = vector.load %arg2[%c0_1, %c0_2] : memref<8x1xi32, #tpu.memory_space<vmem>>, vector<8x1xi32>
    %cst = arith.constant dense<0xFF800000> : vector<8xf32>
    %2 = vector.multi_reduction <maximumf>, %0, %cst [1] : vector<8x16xf32> to vector<8xf32>
    %3 = vector.shape_cast %2 : vector<8xf32> to vector<8x1xf32>
    %4 = vector.broadcast %3 : vector<8x1xf32> to vector<8x16xf32>
    %5 = arith.subf %0, %4 : vector<8x16xf32>
    %6 = math.exp %5 : vector<8x16xf32>
    %cst_3 = arith.constant dense<0.000000e+00> : vector<8xf32>
    %7 = vector.multi_reduction <add>, %6, %cst_3 [1] : vector<8x16xf32> to vector<8xf32>
    %8 = vector.shape_cast %7 : vector<8xf32> to vector<8x1xf32>
    %9 = math.log %8 : vector<8x1xf32>
    %10 = tpu.iota {dimensions = array<i32: 1>} : vector<8x16xi32>
    %11 = vector.broadcast %1 : vector<8x1xi32> to vector<8x16xi32>
    %12 = arith.cmpi eq, %10, %11 : vector<8x16xi32>
    %cst_4 = arith.constant 9.062500e-01 : f32
    %cst_5 = arith.constant 6.250000e-03 : f32
    %13 = vector.broadcast %cst_4 : f32 to vector<8x16xf32>
    %14 = vector.broadcast %cst_5 : f32 to vector<8x16xf32>
    %15 = arith.select %12, %13, %14 : vector<8x16xi1>, vector<8x16xf32>
    %16 = arith.mulf %15, %0 : vector<8x16xf32>
    %cst_6 = arith.constant dense<0.000000e+00> : vector<8xf32>
    %17 = vector.multi_reduction <add>, %16, %cst_6 [1] : vector<8x16xf32> to vector<8xf32>
    %18 = vector.shape_cast %17 : vector<8xf32> to vector<8x1xf32>
    %19 = arith.addf %3, %9 : vector<8x1xf32>
    %20 = arith.subf %19, %18 : vector<8x1xf32>
    %c8_i32 = arith.constant 8 : i32
    %21 = arith.muli %arg0, %c8_i32 : i32
    %22 = tpu.iota {dimensions = array<i32: 0>} : vector<8x1xi32>
    %23 = vector.broadcast %21 : i32 to vector<8x1xi32>
    %24 = arith.addi %23, %22 : vector<8x1xi32>
    %c8_i32_7 = arith.constant 8 : i32
    %25 = vector.broadcast %c8_i32_7 : i32 to vector<8x1xi32>
    %26 = arith.cmpi slt, %24, %25 : vector<8x1xi32>
    %cst_8 = arith.constant 0.000000e+00 : f32
    %27 = vector.broadcast %cst_8 : f32 to vector<8x1xf32>
    %28 = arith.select %26, %20, %27 : vector<8x1xi1>, vector<8x1xf32>
    %29 = vector.shape_cast %28 : vector<8x1xf32> to vector<1x8x1xf32>
    %cst_9 = arith.constant dense<0.000000e+00> : vector<1xf32>
    %30 = vector.multi_reduction <add>, %29, %cst_9 [1, 2] : vector<1x8x1xf32> to vector<1xf32>
    %31 = vector.shape_cast %30 : vector<1xf32> to vector<1x1x1xf32>
    %32 = vector.extract %31[0, 0, 0] : f32 from vector<1x1x1xf32>
    %c0_10 = arith.constant 0 : index
    %c0_11 = arith.constant 0 : index
    %33 = memref.load %arg3[%c0_10, %c0_11] : memref<1x1xf32, #tpu.memory_space<smem>>
    memref.store %32, %arg3[%c0_10, %c0_11] : memref<1x1xf32, #tpu.memory_space<smem>>
    return
  }
  func.func @transform_0(%arg0: i32) -> (i32, i32) {
    %c0_i32 = arith.constant 0 : i32
    %c0_i32_0 = arith.constant 0 : i32
    return %arg0, %c0_i32 : i32, i32
  }
  func.func @transform_1(%arg0: i32) -> (i32, i32) {
    %c0_i32 = arith.constant 0 : i32
    %c0_i32_0 = arith.constant 0 : i32
    return %arg0, %c0_i32 : i32, i32
  }
  func.func @transform_2(%arg0: i32) -> (i32, i32) {
    %c0_i32 = arith.constant 0 : i32
    %c0_i32_0 = arith.constant 0 : i32
    return %arg0, %c0_i32 : i32, i32
  }
}

</mosaic_0001>

<llo_original>
// kernel: tpu_custom_call.1
$region0: #{tpu_custom_call.1}
  #allocation0 [shape = 'u32[]', space=smem, size = 0x4, offset = 0x4, fixed_abs, tag = 'smem constant byte address 0x4 - core index']
  #allocation1 [shape = 'u32[144,128]{1,0:T(1,128)}', space=vmem, size = 0x12000, scoped, tag = 'internal scratch']
  %s0 = inlined_call_operand.vmem [shape: f32[8,16], index: 0, kind: input, shape index: {}]
  %s1 = inlined_call_operand.vmem [shape: s32[8,1], index: 1, kind: input, shape index: {}]
  %s2 = inlined_call_operand.hbm [shape: f32[1,1], index: 2, kind: output, shape index: {}]
  %s3 = sld [smem:[#allocation0]]
  $region18: #{tpu_custom_call.1} parent=0
    _
  %s5 = ssub.s32 1, %s3
  %s6 = scalar_select 0, %s5, %s3
  $region1: #{tpu_custom_call.1} parent=0
    #allocation2 [shape = 'u8[512]{0}', space=smem, size = 0x200, scoped, tag = 'output window, operand 0, single buffered']
    #allocation3 [shape = 's32[1]{0}', space=sflag, size = 0x4, scoped, tag = 'scoped memory for tpu_custom_call.1']
    %7 = vsyncpa [#allocation3], 0
    // Predicated region
    $region2: #{tpu_custom_call.1} parent=1 // pred_check
      _
    $region3: #{tpu_custom_call.1} parent=1 // pred_check_branch
      %9 = sbr.rel (0) target = $region5
    $region4: #{tpu_custom_call.1} parent=1 // pred_region
      _
    $region5: #{tpu_custom_call.1} parent=1 // pred_fallthru
      _
    // Predicated region
    $region6: #{tpu_custom_call.1} parent=1 // pred_check
      _
    $region7: #{tpu_custom_call.1} parent=1 // pred_check_branch
      %11 = sbr.rel (0) target = $region9
    $region8: #{tpu_custom_call.1} parent=1 // pred_region
      _
    $region9: #{tpu_custom_call.1} parent=1 // pred_fallthru
      _
    %v12 = vld [vmem:[%s0] sm:$0xff]
    %v13 = vld [vmem:[%s1] sm:$0xff]
    %vm14 = vcmask 130048
    %v15 = vsel %vm14, %v12, -inf
    %16 = vmax.xlane.f32.xlu0 %v15
    %v17 = vpop.xlane.xlu0 %16
    %v18 = vsub.f32 %v12, %v17
    %v19 = vmul.f32 %v18, 1.442695
    %v20 = vpow.pop %v19
    %v21 = vsel %vm14, %v20, 0.0
    %22 = vadd.xlane.f32.xlu0 %v21
    %v23 = vpop.xlane.xlu0 %22
    %v24 = vlog2.pop %v23
    %v25 = vmul.f32 %v24, 0.6931472
    %v26 = vlaneseq
    %v27 = vand.u32 %v26, 127
    %28 = vset.pattern.permute.xlu0 0
    %29 = vperm.xlu0 %28, %v13
    %v30 = vpop.permute.xlu0 %29
    %vm31 = vcmp.eq.s32.totalorder %v27, %v30
    %v32 = vsel %vm31, 0.90625, 0.00625
    %v33 = vmul.f32 %v32, %v12
    %v34 = vsel %vm14, %v33, 0.0
    %35 = vadd.xlane.f32.xlu0 %v34
    %v36 = vpop.xlane.xlu0 %35
    %v37 = vadd.f32 %v17, %v25
    %v38 = vsub.f32 %v37, %v36
    %s39 = smul.u32 0, 8
    %v40 = vlaneseq
    %v41 = vshrl.u32 %v40, 7
    %v42 = vstv %s39
    %v43 = vadd.s32 %v42, %v41
    %vm44 = vcmp.lt.s32.totalorder %v43, 8
    %v45 = vsel %vm44, %v38, 0.0
    %vm46 = vcmask 7168
    %v47 = vsel %vm46, %v45, 0.0
    %48 = vadd.xlane.f32.xlu0 %v47
    %v49 = vpop.xlane.xlu0 %48
    %v50 = vrot.slane %v49, 4
    %v51 = vadd.f32 %v49, %v50
    %v52 = vrot.slane %v51, 2
    %v53 = vadd.f32 %v51, %v52
    %v54 = vrot.slane %v53, 1
    %v55 = vadd.f32 %v53, %v54
    %s56 = vtos %v55
    %s57 = scalar_lea.smem [#allocation2], 0
    %58 = sst [smem:[%s57]] %s56
    // Predicated region
    $region10: #{tpu_custom_call.1} parent=1 // pred_check
      _
    $region11: #{tpu_custom_call.1} parent=1 // pred_check_branch
      %60 = sbr.rel (0) target = $region13
    $region12: #{tpu_custom_call.1} parent=1 // pred_region
      %s62 = ssub.s32 16, 16
      %63 = vsyncadd [#allocation3], %s62
      %66 = dma.smem_to_hbm [#allocation2], 16, %s2, [#allocation3]
    $region13: #{tpu_custom_call.1} parent=1 // pred_fallthru
      _
    // Predicated region
    $region14: #{tpu_custom_call.1} parent=1 // pred_check
      _
    $region15: #{tpu_custom_call.1} parent=1 // pred_check_branch
      %68 = sbr.rel (0) target = $region17
    $region16: #{tpu_custom_call.1} parent=1 // pred_region
      %69 = dma.done [#allocation3], 16
    $region17: #{tpu_custom_call.1} parent=1 // pred_fallthru
      _
    %70 = sfence
    %71 = vsyncpa [#allocation3], 1

</llo_original>
